<compile_context>
chip_gen: v6e
topology: v6e:2x2x1
jax: 0.10.0
libtpu: 0.0.40
codegen_flags: <defaults>
</compile_context>

<pallas_src>
import functools

import jax
import jax.numpy as jnp
import numpy as np
from jax import lax
from jax.experimental import pallas as pl
from jax.experimental.pallas import tpu as pltpu


def _round_up(x, m):
    return (x + m - 1) // m * m


def _padded_tile_bytes(rows, cols, itemsize, sublane=8, lane=128):
    """Bytes a 2-D tile really occupies in VMEM under (8, 128) layout padding."""
    return (_round_up(max(int(rows), 1), sublane)
            * _round_up(max(int(cols), 1), lane) * itemsize)


def _tpu_vmem_capacity_bytes():
    """Physical per-core VMEM; conservative fallback if the query is missing."""
    try:
        cap = int(pltpu.get_tpu_info().vmem_capacity_bytes)
        if cap > 0:
            return cap
    except Exception:
        pass
    return 64 * 1024 * 1024  # v7x per-TensorCore physical VMEM (smallest case)


def _vmem_bytes_per_tile(tb, n_pad, d_dyn, d_loc, h_dim, in_itemsize, out_itemsize):
    """Padded VMEM footprint of one grid step: double-buffered BlockSpec DMAs
    plus the in-kernel operand / activation intermediates."""
    dyn_blk = tb * _padded_tile_bytes(n_pad, d_dyn, in_itemsize)
    loc_blk = tb * _padded_tile_bytes(n_pad, d_loc, in_itemsize) if d_loc else 0
    out_blk = _padded_tile_bytes(tb, h_dim, out_itemsize)
    d_in = d_dyn + d_loc
    rows = tb * n_pad
    x_cat = _padded_tile_bytes(rows, d_in, in_itemsize)   # lane-concat of dyn/loc
    x_mxu = _padded_tile_bytes(rows, d_in, 2)             # bf16 MXU operand
    h_f32 = _padded_tile_bytes(rows, h_dim, 4)            # post-linear activations
    misc = _padded_tile_bytes(rows, 128, 4)               # att / mask / pooled temps
    params = _padded_tile_bytes(d_in, h_dim, 2) + _padded_tile_bytes(1, h_dim, 4)
    return 2 * (dyn_blk + loc_blk + out_blk + params) + x_cat + x_mxu + 2 * h_f32 + misc


def _pick_batch_tile(b, n_pad, d_dyn, d_loc, h_dim, in_itemsize, out_itemsize, budget):
    """Largest 8-aligned batch tile under the padded-VMEM budget, capped so
    larger batches get >= ~4 grid steps (keeps both v7x TensorCores busy and
    lets BlockSpec double-buffering hide the HBM reads)."""
    if b <= 8:
        return b
    multi_step_cap = max(8, _round_up(pl.cdiv(b, 4), 8))
    hard_cap = min(_round_up(b, 8), multi_step_cap)
    tb = 8
    while tb + 8 <= hard_cap and _vmem_bytes_per_tile(
            tb + 8, n_pad, d_dyn, d_loc, h_dim, in_itemsize, out_itemsize) <= budget:
        tb += 8
    return tb


def _concat_embed_pool_kernel(*refs, has_loc, distpool, inv_sigma, n_valid):
    """pooled[b, :] = pool_n( relu( [dyn, loc] @ W + b ) ) for one batch tile."""
    if has_loc:
        dyn_ref, loc_ref, w_ref, b_ref, out_ref = refs
    else:
        dyn_ref, w_ref, b_ref, out_ref = refs
        loc_ref = None

    tb, n_pad, _ = dyn_ref.shape
    h_dim = out_ref.shape[-1]

    # (tb, n, d) -> (tb*n, d) is a layout no-op because n_pad % 8 == 0.
    dyn2 = dyn_ref[...].reshape(tb * n_pad, -1)
    if has_loc:
        loc2 = loc_ref[...].reshape(tb * n_pad, -1)
        # Lane-concat in VMEM -> ONE full-width MXU matmul instead of two
        # split-weight dots (each of which would pad K to the full MXU width).
        x = jnp.concatenate([dyn2, loc2], axis=-1)
    else:
        x = dyn2

    # Feed the MXU in the weight's (bf16) dtype; accumulate in f32.
    h = jnp.dot(x.astype(w_ref.dtype), w_ref[...],
                preferred_element_type=jnp.float32)
    h = h + b_ref[...].astype(jnp.float32)        # (1, H) broadcast
    h = jnp.maximum(h, 0.0)                       # ReLU (module default)
    # TODO(synk): Tanh activation variant of the module is not implemented.

    h3 = h.reshape(tb, n_pad, h_dim)
    padded = n_pad != n_valid
    if padded:
        agent = lax.broadcasted_iota(jnp.int32, (tb, n_pad, 1), 1)
        valid = agent < n_valid

    if distpool:
        loc_f = loc2.astype(jnp.float32)
        sq = jnp.sum(loc_f * loc_f, axis=-1, keepdims=True)     # XLU lane reduce
        # exp / sqrt run on the EUP; 1/sigma and 1/N are folded into the weight
        # (no VPU divides).
        att = jnp.exp(-jnp.sqrt(sq) * inv_sigma) * (1.0 / n_valid)
        hw = h3 * att.reshape(tb, n_pad, 1)
        if padded:
            hw = jnp.where(valid, hw, 0.0)
        pooled = jnp.sum(hw, axis=1)
    else:
        if padded:
            # Safe mask value: ReLU output is >= 0, so a 0 row never beats the
            # true max (and equals it when the true max is 0).
            h3 = jnp.where(valid, h3, 0.0)
        pooled = jnp.max(h3, axis=1)

    out_ref[...] = pooled.astype(out_ref.dtype)


def concatenator_forward(kinetic, dynamic, weight, bias, ori_last_loc=None,
                         distpool=False, sigma=None, batch_tile=None,
                         mxu_dtype=jnp.bfloat16):
    """Pallas implementation of Concatenator.forward (ReLU activation).

    kinetic:      (B, K)
    dynamic:      (B, N, D_dyn)
    ori_last_loc: (B, N, D_loc) or None
    weight:       (D_dyn [+ D_loc], H)  -- input-major (already transposed)
    bias:         (1, H)
    returns:      (B, K + H)
    """
    b_sz, n, d_dyn = dynamic.shape
    h_dim = weight.shape[1]
    has_loc = ori_last_loc is not None
    d_loc = ori_last_loc.shape[-1] if has_loc else 0
    assert weight.shape[0] == d_dyn + d_loc
    if distpool:
        assert has_loc and sigma is not None

    # Pad the agent axis to a sublane multiple; padded agents are masked out of
    # the pooling inside the kernel.
    n_pad = _round_up(n, 8)
    if n_pad != n:
        pad = ((0, 0), (0, n_pad - n), (0, 0))
        dynamic = jnp.pad(dynamic, pad)
        if has_loc:
            ori_last_loc = jnp.pad(ori_last_loc, pad)

    # Cast the weight for the MXU once in the wrapper (bf16-native on all MXUs).
    w_mxu = weight.astype(mxu_dtype) if mxu_dtype is not None else weight

    out_dtype = jnp.result_type(kinetic.dtype, dynamic.dtype)
    in_itemsize = jnp.dtype(dynamic.dtype).itemsize
    out_itemsize = jnp.dtype(out_dtype).itemsize

    vmem_cap = _tpu_vmem_capacity_bytes()
    tile_budget = min(vmem_cap // 4, 24 * 1024 * 1024)

    if batch_tile is not None:
        tb = max(1, min(int(batch_tile), b_sz))
        if tb < b_sz:
            tb = max(8, (tb // 8) * 8)      # keep the output sublane dim 8-aligned
    else:
        tb = _pick_batch_tile(b_sz, n_pad, d_dyn, d_loc, h_dim,
                              in_itemsize, out_itemsize, tile_budget)
    tb = min(tb, b_sz)
    grid = (pl.cdiv(b_sz, tb),)

    footprint = _vmem_bytes_per_tile(tb, n_pad, d_dyn, d_loc, h_dim,
                                     in_itemsize, out_itemsize)
    vmem_limit = int(min(vmem_cap * 3 // 4,
                         max(footprint + (8 << 20), 32 << 20)))

    kernel = functools.partial(
        _concat_embed_pool_kernel,
        has_loc=has_loc,
        distpool=bool(distpool),
        inv_sigma=float(1.0 / sigma) if distpool else 0.0,
        n_valid=n,
    )

    in_specs = [pl.BlockSpec((tb, n_pad, d_dyn), lambda i: (i, 0, 0))]
    args = [dynamic]
    if has_loc:
        in_specs.append(pl.BlockSpec((tb, n_pad, d_loc), lambda i: (i, 0, 0)))
        args.append(ori_last_loc)
    # Weight / bias blocks are grid-index invariant -> fetched once, stay resident.
    in_specs += [pl.BlockSpec(w_mxu.shape, lambda i: (0, 0)),
                 pl.BlockSpec(bias.shape, lambda i: (0, 0))]
    args += [w_mxu, bias]

    pooled = pl.pallas_call(
        kernel,
        out_shape=jax.ShapeDtypeStruct((b_sz, h_dim), out_dtype),
        grid=grid,
        in_specs=in_specs,
        out_specs=pl.BlockSpec((tb, h_dim), lambda i: (i, 0)),
        compiler_params=pltpu.CompilerParams(
            dimension_semantics=("parallel",),
            vmem_limit_bytes=vmem_limit),
    )(*args)

    # kinetic is a pure passthrough: concat it outside the kernel (no DMA cost
    # inside, keeps the kernel's output store lane-dense at column 0).
    return jnp.concatenate([kinetic.astype(out_dtype), pooled], axis=-1)


def reference_forward(kinetic, dynamic, weight, bias, ori_last_loc=None,
                      distpool=False, sigma=None):
    """Plain-JAX mirror of the PyTorch module's forward (f32 gold standard)."""
    if ori_last_loc is not None:
        dynamic = jnp.concatenate([dynamic, ori_last_loc], axis=-1)
    h = jnp.maximum(jnp.matmul(dynamic, weight,
                               precision=jax.lax.Precision.HIGHEST) + bias, 0.0)
    if distpool:
        att = jnp.exp(-jnp.linalg.norm(ori_last_loc, axis=-1, keepdims=True) / sigma)
        pooled = jnp.mean(h * att, axis=1)
    else:
        pooled = jnp.max(h, axis=1)
    return jnp.concatenate([kinetic, pooled], axis=-1)


if __name__ == "__main__":
    key = jax.random.PRNGKey(0)
    (k_kin, k_dyn, k_loc, k_w1, k_w2,
     k_kin4, k_dyn4, k_loc4, k_dyn5, k_loc5) = jax.random.split(key, 10)

    B, N = 2, 8
    D_DYN, D_LOC = 24, 8
    HIDDEN, K_KIN = 32, 16
    SIGMA = 2.0
    # The kernel deliberately feeds the MXU bf16 operands (f32 accumulation);
    # compare against a HIGHEST-precision f32 reference with a matching tolerance.
    RTOL = ATOL = 5e-2

    kinetic = jax.random.normal(k_kin, (B, K_KIN), dtype=jnp.float32)

    # --- case 1: defaults (no ori_last_loc, max pool) ------------------------
    dynamic1 = jax.random.normal(k_dyn, (B, N, 32), dtype=jnp.float32)
    w1 = jax.random.normal(k_w1, (32, HIDDEN), dtype=jnp.float32) * jnp.sqrt(2.0 / 32)
    b1 = jnp.zeros((1, HIDDEN), dtype=jnp.float32)
    out1 = jax.block_until_ready(concatenator_forward(kinetic, dynamic1, w1, b1))
    ref1 = reference_forward(kinetic, dynamic1, w1, b1)
    np.testing.assert_allclose(np.asarray(out1), np.asarray(ref1), rtol=RTOL, atol=ATOL)

    # --- case 2: ori_last_loc + max pool -------------------------------------
    dynamic2 = jax.random.normal(k_dyn, (B, N, D_DYN), dtype=jnp.float32)
    loc2 = jax.random.normal(k_loc, (B, N, D_LOC), dtype=jnp.float32)
    d_in2 = D_DYN + D_LOC
    w2 = jax.random.normal(k_w2, (d_in2, HIDDEN), dtype=jnp.float32) * jnp.sqrt(2.0 / d_in2)
    b2 = jnp.zeros((1, HIDDEN), dtype=jnp.float32)
    out2 = jax.block_until_ready(
        concatenator_forward(kinetic, dynamic2, w2, b2, ori_last_loc=loc2))
    ref2 = reference_forward(kinetic, dynamic2, w2, b2, ori_last_loc=loc2)
    np.testing.assert_allclose(np.asarray(out2), np.asarray(ref2), rtol=RTOL, atol=ATOL)

    # --- case 3: ori_last_loc + distpool -------------------------------------
    out3 = jax.block_until_ready(
        concatenator_forward(kinetic, dynamic2, w2, b2, ori_last_loc=loc2,
                             distpool=True, sigma=SIGMA))
    ref3 = reference_forward(kinetic, dynamic2, w2, b2, ori_last_loc=loc2,
                             distpool=True, sigma=SIGMA)
    np.testing.assert_allclose(np.asarray(out3), np.asarray(ref3), rtol=RTOL, atol=ATOL)

    # --- case 4: larger batch exercising the pipelined batch grid (3 tiles) --
    B4 = 24
    kin4 = jax.random.normal(k_kin4, (B4, K_KIN), dtype=jnp.float32)
    dyn4 = jax.random.normal(k_dyn4, (B4, N, D_DYN), dtype=jnp.float32)
    loc4 = jax.random.normal(k_loc4, (B4, N, D_LOC), dtype=jnp.float32)
    out4 = jax.block_until_ready(
        concatenator_forward(kin4, dyn4, w2, b2, ori_last_loc=loc4,
                             distpool=True, sigma=SIGMA, batch_tile=8))
    ref4 = reference_forward(kin4, dyn4, w2, b2, ori_last_loc=loc4,
                             distpool=True, sigma=SIGMA)
    np.testing.assert_allclose(np.asarray(out4), np.asarray(ref4), rtol=RTOL, atol=ATOL)

    # --- case 5/6: agent axis not sublane-aligned (N=6 -> pad to 8 + mask) ---
    N5 = 6
    dyn5 = jax.random.normal(k_dyn5, (B, N5, D_DYN), dtype=jnp.float32)
    loc5 = jax.random.normal(k_loc5, (B, N5, D_LOC), dtype=jnp.float32)
    out5 = jax.block_until_ready(
        concatenator_forward(kinetic, dyn5, w2, b2, ori_last_loc=loc5))
    ref5 = reference_forward(kinetic, dyn5, w2, b2, ori_last_loc=loc5)
    np.testing.assert_allclose(np.asarray(out5), np.asarray(ref5), rtol=RTOL, atol=ATOL)
    out6 = jax.block_until_ready(
        concatenator_forward(kinetic, dyn5, w2, b2, ori_last_loc=loc5,
                             distpool=True, sigma=SIGMA))
    ref6 = reference_forward(kinetic, dyn5, w2, b2, ori_last_loc=loc5,
                             distpool=True, sigma=SIGMA)
    np.testing.assert_allclose(np.asarray(out6), np.asarray(ref6), rtol=RTOL, atol=ATOL)

    print("KERNEL_OK")
</pallas_src>

<mosaic_0001>
module attributes {stable_mosaic.version = 11 : i64} {
  func.func @_concat_embed_pool_kernel(%arg0: i32, %arg1: memref<2x8x32xf32, #tpu.memory_space<vmem>>, %arg2: memref<32x32xbf16, #tpu.memory_space<vmem>>, %arg3: memref<1x32xf32, #tpu.memory_space<vmem>>, %arg4: memref<2x32xf32, #tpu.memory_space<vmem>>) attributes {dimension_semantics = [#tpu.dimension_semantics<parallel>], iteration_bounds = array<i64: 1>, scalar_prefetch = 0 : i64, scratch_operands = 0 : i64, tpu.core_type = #tpu.core_type<tc>, window_params = [{transform_indices = @transform_0, window_bounds = array<i64: 2, 8, 32>}, {pipeline_mode = #tpu.pipeline_mode<synchronous>, transform_indices = @transform_1, window_bounds = array<i64: 32, 32>}, {pipeline_mode = #tpu.pipeline_mode<synchronous>, transform_indices = @transform_2, window_bounds = array<i64: 1, 32>}, {transform_indices = @transform_3, window_bounds = array<i64: 2, 32>}]} {
    %c0 = arith.constant 0 : index
    %c0_0 = arith.constant 0 : index
    %c0_1 = arith.constant 0 : index
    %0 = vector.load %arg1[%c0, %c0_0, %c0_1] : memref<2x8x32xf32, #tpu.memory_space<vmem>>, vector<2x8x32xf32>
    %1 = vector.shape_cast %0 : vector<2x8x32xf32> to vector<16x32xf32>
    %2 = arith.truncf %1 : vector<16x32xf32> to vector<16x32xbf16>
    %c0_2 = arith.constant 0 : index
    %c0_3 = arith.constant 0 : index
    %3 = vector.load %arg2[%c0_2, %c0_3] : memref<32x32xbf16, #tpu.memory_space<vmem>>, vector<32x32xbf16>
    %cst = arith.constant dense<0.000000e+00> : vector<16x32xf32>
    %4 = tpu.matmul %2, %3, %cst {dimension_numbers = #tpu.dot_dimension_numbers<[1], [0], [0], [1], [0, 0, 1, 1], [], []>} : vector<16x32xbf16>, vector<32x32xbf16>, vector<16x32xf32> -> vector<16x32xf32>
    %c0_4 = arith.constant 0 : index
    %c0_5 = arith.constant 0 : index
    %5 = vector.load %arg3[%c0_4, %c0_5] : memref<1x32xf32, #tpu.memory_space<vmem>>, vector<1x32xf32>
    %6 = vector.broadcast %5 : vector<1x32xf32> to vector<16x32xf32>
    %7 = arith.addf %4, %6 : vector<16x32xf32>
    %cst_6 = arith.constant 0.000000e+00 : f32
    %8 = vector.broadcast %cst_6 : f32 to vector<16x32xf32>
    %9 = arith.maximumf %7, %8 : vector<16x32xf32>
    %10 = vector.shape_cast %9 : vector<16x32xf32> to vector<2x8x32xf32>
    %cst_7 = arith.constant dense<0xFF800000> : vector<2x32xf32>
    %11 = vector.multi_reduction <maximumf>, %10, %cst_7 [1] : vector<2x8x32xf32> to vector<2x32xf32>
    %c0_8 = arith.constant 0 : index
    %c0_9 = arith.constant 0 : index
    %12 = vector.load %arg4[%c0_8, %c0_9] : memref<2x32xf32, #tpu.memory_space<vmem>>, vector<2x32xf32>
    tpu.vector_store %arg4[%c0_8, %c0_9], %11 {strides = array<i32>} : memref<2x32xf32, #tpu.memory_space<vmem>>, vector<2x32xf32>,
    return
  }
  func.func @transform_0(%arg0: i32) -> (i32, i32, i32) {
    %c0_i32 = arith.constant 0 : i32
    %c0_i32_0 = arith.constant 0 : i32
    %c0_i32_1 = arith.constant 0 : i32
    return %arg0, %c0_i32, %c0_i32_0 : i32, i32, i32
  }
  func.func @transform_1(%arg0: i32) -> (i32, i32) {
    %c0_i32 = arith.constant 0 : i32
    %c0_i32_0 = arith.constant 0 : i32
    %c0_i32_1 = arith.constant 0 : i32
    return %c0_i32, %c0_i32_0 : i32, i32
  }
  func.func @transform_2(%arg0: i32) -> (i32, i32) {
    %c0_i32 = arith.constant 0 : i32
    %c0_i32_0 = arith.constant 0 : i32
    %c0_i32_1 = arith.constant 0 : i32
    return %c0_i32, %c0_i32_0 : i32, i32
  }
  func.func @transform_3(%arg0: i32) -> (i32, i32) {
    %c0_i32 = arith.constant 0 : i32
    %c0_i32_0 = arith.constant 0 : i32
    return %arg0, %c0_i32 : i32, i32
  }
}

</mosaic_0001>

<llo_original>
// kernel: tpu_custom_call.1
$region0: #{tpu_custom_call.1}
  #allocation0 [shape = 'u32[]', space=smem, size = 0x4, offset = 0x4, fixed_abs, tag = 'smem constant byte address 0x4 - core index']
  #allocation1 [shape = 'u32[144,128]{1,0:T(1,128)}', space=vmem, size = 0x12000, scoped, tag = 'internal scratch']
  %s0 = inlined_call_operand.hbm [shape: f32[2,8,32], index: 0, kind: input, shape index: {}]
  %s1 = inlined_call_operand.hbm [shape: bf16[32,32], index: 1, kind: input, shape index: {}]
  %s2 = inlined_call_operand.vmem [shape: f32[1,32], index: 2, kind: input, shape index: {}]
  %s3 = inlined_call_operand.hbm [shape: f32[2,32], index: 3, kind: output, shape index: {}]
  %s4 = sld [smem:[#allocation0]]
  $region30: #{tpu_custom_call.1} parent=0
    _
  %s6 = ssub.s32 1, %s4
  %s7 = scalar_select 0, %s6, %s4
  $region1: #{tpu_custom_call.1} parent=0
    #allocation2 [shape = 'u8[8192]{0}', space=vmem, size = 0x2000, scoped, tag = 'input window, operand 0, single buffered']
    #allocation3 [shape = 's32[1]{0}', space=sflag, size = 0x4, scoped, tag = 'scoped memory for tpu_custom_call.1']
    #allocation4 [shape = 's32[1]{0}', space=sflag, size = 0x4, scoped, tag = 'scoped memory for tpu_custom_call.1']
    #allocation5 [shape = 'u8[8192]{0}', space=vmem, size = 0x2000, scoped, tag = 'input window, operand 1, single buffered']
    #allocation6 [shape = 's32[1]{0}', space=sflag, size = 0x4, scoped, tag = 'scoped memory for tpu_custom_call.1']
    #allocation7 [shape = 'u8[1024]{0}', space=vmem, size = 0x400, scoped, tag = 'output window, operand 0, single buffered']
    %8 = vsyncpa [#allocation3], 0
    %9 = vsyncpa [#allocation6], 0
    %10 = vsyncpa [#allocation4], 0
    // Predicated region
    $region2: #{tpu_custom_call.1} parent=1 // pred_check
      _
    $region3: #{tpu_custom_call.1} parent=1 // pred_check_branch
      %12 = sbr.rel (0) target = $region5
    $region4: #{tpu_custom_call.1} parent=1 // pred_region
      %s14 = ssub.s32 256, 256
      %15 = vsyncadd [#allocation3], %s14
      %s16 = sshll.u32 [#allocation2], 4
      %s17 = int_to_ptr.vmem [resolvable:$true] %s16
      %22 = dma.hbm_to_vmem [thread:$0]  %s0, 256, %s17, [#allocation3], 128, 128, 8
    $region5: #{tpu_custom_call.1} parent=1 // pred_fallthru
      _
    // Predicated region
    $region6: #{tpu_custom_call.1} parent=1 // pred_check
      _
    $region7: #{tpu_custom_call.1} parent=1 // pred_check_branch
      %24 = sbr.rel (0) target = $region9
    $region8: #{tpu_custom_call.1} parent=1 // pred_region
      %s26 = ssub.s32 256, 256
      %27 = vsyncadd [#allocation6], %s26
      %s28 = sshll.u32 [#allocation5], 4
      %s29 = int_to_ptr.vmem [resolvable:$true] %s28
      %34 = dma.hbm_to_vmem [thread:$0]  %s1, 256, %s29, [#allocation6], 64, 64, 4
    $region9: #{tpu_custom_call.1} parent=1 // pred_fallthru
      _
    // Predicated region
    $region10: #{tpu_custom_call.1} parent=1 // pred_check
      _
    $region11: #{tpu_custom_call.1} parent=1 // pred_check_branch
      %36 = sbr.rel (0) target = $region13
    $region12: #{tpu_custom_call.1} parent=1 // pred_region
      _
    $region13: #{tpu_custom_call.1} parent=1 // pred_fallthru
      _
    // Predicated region
    $region14: #{tpu_custom_call.1} parent=1 // pred_check
      _
    $region15: #{tpu_custom_call.1} parent=1 // pred_check_branch
      %38 = sbr.rel (0) target = $region17
    $region16: #{tpu_custom_call.1} parent=1 // pred_region
      %39 = dma.done [#allocation3], 256
    $region17: #{tpu_custom_call.1} parent=1 // pred_fallthru
      _
    // Predicated region
    $region18: #{tpu_custom_call.1} parent=1 // pred_check
      _
    $region19: #{tpu_custom_call.1} parent=1 // pred_check_branch
      %41 = sbr.rel (0) target = $region21
    $region20: #{tpu_custom_call.1} parent=1 // pred_region
      %42 = dma.done [#allocation6], 256
    $region21: #{tpu_custom_call.1} parent=1 // pred_fallthru
      _
    %v44 = vld [vmem:[#allocation2] sm:$0xff]
    %v45 = vld [vmem:[#allocation2 + $0x8] sm:$0xff]
    %v46 = vpack.c.bf16 %v45, %v44
    %v47 = vld [vmem:[#allocation5] sm:$0xf]
    %v48 = vld [vmem:[#allocation5 + $0x4] sm:$0xf]
    %v49 = vld [vmem:[#allocation5 + $0x8] sm:$0xf]
    %v50 = vld [vmem:[#allocation5 + $0xc] sm:$0xf]
    %v51 = vld [vmem:[%s2] sm:$0x1]
    %v53 = vlaneseq
    %v54 = vshrl.u32 %v53, 7
    %v55 = vsub.s32 0, %v54
    %v56 = vrot.slane %v51, %v55
    %v62 = vunpack.c.l.b16 %v47
    %v63 = vunpack.c.l.b16 %v48
    %v64 = vunpack.c.l.b16 %v49
    %v65 = vunpack.c.l.b16 %v50
    %v66 = vpack.c.b16 %v63, %v62
    %v67 = vpack.c.b16 %v65, %v64
    %vm70 = vcmask 261120
    %v72 = vsel %vm70, %v46, 0
    %74 = vmatprep.subr.bf16.mxu0 0
    %75 = vmatpush1.bf16.msra.mxu0 0
    %76 = vmatprep.subr.bf16.mxu0 0
    %77 = vmatpush1.bf16.msra.mxu0 0
    %78 = vmatprep.subr.bf16.mxu0 0
    %79 = vmatpush1.bf16.msra.mxu0 0
    %80 = vmatprep.subr.bf16.mxu0 0
    %81 = vmatpush1.bf16.msra.mxu0 0
    %82 = vmatprep.subr.bf16.mxu0 0
    %83 = vmatpush1.bf16.msra.mxu0 0
    %84 = vmatprep.subr.bf16.mxu0 0
    %85 = vmatpush1.bf16.msra.mxu0 0
    %86 = vmatprep.subr.bf16.mxu0 0
    %87 = vmatpush1.bf16.msra.mxu0 %v67
    %88 = vmatprep.subr.bf16.mxu0 0
    %89 = vmatpush1.bf16.msra.mxu0 %v66
    %90 = vmatprep.subr.bf16.mxu0 0
    %91 = vmatpush2.bf16.msra.mxu0 0
    %92 = vmatprep.subr.bf16.mxu0 0
    %93 = vmatpush2.bf16.msra.mxu0 0
    %94 = vmatprep.subr.bf16.mxu0 0
    %95 = vmatpush2.bf16.msra.mxu0 0
    %96 = vmatprep.subr.bf16.mxu0 0
    %97 = vmatpush2.bf16.msra.mxu0 0
    %98 = vmatprep.subr.bf16.mxu0 0
    %99 = vmatpush2.bf16.msra.mxu0 0
    %100 = vmatprep.subr.bf16.mxu0 0
    %101 = vmatpush2.bf16.msra.mxu0 0
    %102 = vmatprep.subr.bf16.mxu0 0
    %103 = vmatpush2.bf16.msra.mxu0 0
    %104 = vmatprep.subr.bf16.mxu0 0
    %105 = vmatpush2.bf16.msra.mxu0 0
    %106 = vmatprep.mubr.bf16.mxu0 0
    %107 = vmatmul.mubr.bf16.gmra.mxu0 %v72
    %v108 = vpop.f32.mrf.mxu0
    %v109 = vadd.f32 %v56, %v108
    %v110 = vpop.f32.mrf.mxu0
    %v111 = vpop.f32.mrf.mxu0
    %v112 = vadd.f32 %v56, %v111
    %v113 = vpop.f32.mrf.mxu0
    %114 = vdwg.mxu0
    %v115 = vmax.f32 %v109, 0.0
    %v116 = vmax.f32 %v112, 0.0
    %v117 = vsel %vm70, %v115, -inf
    %v118 = vrot.slane %v117, 4
    %v119 = vmax.f32 %v117, %v118
    %v120 = vrot.slane %v119, 2
    %v121 = vmax.f32 %v119, %v120
    %v122 = vrot.slane %v121, 1
    %v123 = vmax.f32 %v121, %v122
    %v124 = vsel %vm70, %v116, -inf
    %v125 = vrot.slane %v124, 4
    %v126 = vmax.f32 %v124, %v125
    %v127 = vrot.slane %v126, 2
    %v128 = vmax.f32 %v126, %v127
    %v129 = vrot.slane %v128, 1
    %v130 = vmax.f32 %v128, %v129
    %vm133 = vcmask 1041409
    %v134 = vsel %vm133, %v130, %v123
    %vm136 = vcmask 254976
    %137 = vst.msk [vmem:[#allocation7] sm:$0x3] %vm136, %v134
    // Predicated region
    $region22: #{tpu_custom_call.1} parent=1 // pred_check
      _
    $region23: #{tpu_custom_call.1} parent=1 // pred_check_branch
      %139 = sbr.rel (0) target = $region25
    $region24: #{tpu_custom_call.1} parent=1 // pred_region
      %s141 = ssub.s32 32, 32
      %142 = vsyncadd [#allocation4], %s141
      %s144 = sshll.u32 [#allocation7], 4
      %s145 = int_to_ptr.vmem [resolvable:$true] %s144
      %147 = dma.vmem_to_hbm [thread:$0]  %s145, 32, %s3, [#allocation4]
    $region25: #{tpu_custom_call.1} parent=1 // pred_fallthru
      _
    // Predicated region
    $region26: #{tpu_custom_call.1} parent=1 // pred_check
      _
    $region27: #{tpu_custom_call.1} parent=1 // pred_check_branch
      %149 = sbr.rel (0) target = $region29
    $region28: #{tpu_custom_call.1} parent=1 // pred_region
      %150 = dma.done [#allocation4], 32
    $region29: #{tpu_custom_call.1} parent=1 // pred_fallthru
      _
    %151 = vsyncpa [#allocation3], 1
    %152 = vsyncpa [#allocation6], 1
    %153 = vsyncpa [#allocation4], 1

</llo_original>
